<compile_context>
chip_gen: v5e
topology: v5e:2x2
jax: 0.10.0
libtpu: 0.0.40
codegen_flags: <defaults>
</compile_context>

<pallas_src>
import jax
import jax.numpy as jnp
from jax.experimental import pallas as pl
from jax.experimental.pallas import tpu as pltpu


def _dma_copy_kernel(x_ref, o_ref, sem):
    # Single bulk HBM->HBM DMA; no VMEM staging, no tiling, no per-tile cost.
    cp = pltpu.make_async_copy(x_ref, o_ref, sem)
    cp.start()
    cp.wait()


def _dma_copy(x):
    """Materialize a fresh buffer with the contents of `x` via one bulk DMA."""
    return pl.pallas_call(
        _dma_copy_kernel,
        out_shape=jax.ShapeDtypeStruct(x.shape, x.dtype),
        in_specs=[pl.BlockSpec(memory_space=pl.ANY)],   # raw HBM ref, no auto-DMA
        out_specs=pl.BlockSpec(memory_space=pl.ANY),    # raw HBM ref, no auto-DMA
        scratch_shapes=[pltpu.SemaphoreType.DMA],
    )(x)


def squeeze(x, dim):
    """Pallas implementation of torch.Tensor.squeeze(dim).

    Removes dimension `dim` iff it has size 1, matching PyTorch semantics
    (no-op otherwise, returning the input unchanged).
    """
    if x.ndim == 0:
        return x
    d = dim % x.ndim
    if x.shape[d] != 1:
        # PyTorch: squeezing a dim whose size != 1 is a no-op and returns the
        # same tensor — early-return, no copy, no extra HBM traffic.
        return x

    out_shape = x.shape[:d] + x.shape[d + 1:]
    # The actual squeeze is a metadata-only reshape (free / bitcast), exactly
    # as in PyTorch where squeeze() is a view.
    x_sq = x.reshape(out_shape)

    if x_sq.size == 0 or x_sq.ndim == 0:
        # Degenerate cases (empty tensor / 0-d result): nothing for a DMA to do.
        return x_sq

    # Materialize the result with a single bulk HBM->HBM DMA so an explicit
    # Pallas kernel stays in the path while running at HBM copy bandwidth.
    return _dma_copy(x_sq)


if __name__ == "__main__":
    key = jax.random.PRNGKey(0)

    # --- case 1: typical attgan usage — squeeze dim=1 of size 1 (small shape)
    x = jax.random.normal(key, (2, 1, 4, 16, 16), dtype=jnp.float32)
    out = jax.block_until_ready(squeeze(x, dim=1))
    ref = jnp.squeeze(x, axis=1)
    assert out.shape == (2, 4, 16, 16), out.shape
    assert jnp.array_equal(out, ref), "mismatch vs jnp.squeeze (case 1)"

    # --- case 2: larger input to exercise a multi-MiB bulk DMA
    x2 = jax.random.normal(jax.random.PRNGKey(1), (4, 1, 64, 32, 64),
                           dtype=jnp.float32)  # 2 MiB
    out2 = jax.block_until_ready(squeeze(x2, dim=1))
    assert out2.shape == (4, 64, 32, 64), out2.shape
    assert jnp.array_equal(out2, jnp.squeeze(x2, axis=1)), "mismatch (case 2)"

    # --- case 3: negative dim, size-1 trailing dim (non-(8,128)-aligned result)
    x3 = jax.random.normal(key, (2, 4, 16, 1), dtype=jnp.float32)
    out3 = jax.block_until_ready(squeeze(x3, dim=-1))
    assert out3.shape == (2, 4, 16) and jnp.array_equal(out3, x3[..., 0])

    # --- case 4: no-op path (dim size != 1) -> early return, zero copies
    out4 = jax.block_until_ready(squeeze(x3, dim=1))
    assert out4.shape == x3.shape and jnp.array_equal(out4, x3)

    # --- case 5: sub-32-bit dtype (bulk DMA is dtype/layout agnostic)
    x5 = jax.random.normal(key, (2, 1, 8, 128), dtype=jnp.bfloat16)
    out5 = jax.block_until_ready(squeeze(x5, dim=1))
    assert out5.shape == (2, 8, 128)
    assert jnp.array_equal(out5, jnp.squeeze(x5, axis=1)), "mismatch (case 5)"

    print("KERNEL_OK")
</pallas_src>

<mosaic_0001>
module attributes {stable_mosaic.version = 11 : i64} {
  func.func @_dma_copy_kernel(%arg0: memref<2x4x16x16xf32, #tpu.memory_space<any>>, %arg1: memref<2x4x16x16xf32, #tpu.memory_space<any>>, %arg2: memref<!tpu.dma_semaphore, #tpu.memory_space<semaphore_mem>>) attributes {dimension_semantics = [], scalar_prefetch = 0 : i64, scratch_operands = 1 : i64, tpu.core_type = #tpu.core_type<tc>} {
    tpu.enqueue_dma source(%arg0 : memref<2x4x16x16xf32, #tpu.memory_space<any>>) target(%arg1 : memref<2x4x16x16xf32, #tpu.memory_space<any>>) target_semaphore(%arg2 : memref<!tpu.dma_semaphore, #tpu.memory_space<semaphore_mem>>)
    tpu.wait_dma2 semaphore(%arg2 : memref<!tpu.dma_semaphore, #tpu.memory_space<semaphore_mem>>) src(%arg0 : memref<2x4x16x16xf32, #tpu.memory_space<any>>) dst(%arg1 : memref<2x4x16x16xf32, #tpu.memory_space<any>>)
    return
  }
}

</mosaic_0001>

<llo_original>
// kernel: tpu_custom_call.1
$region0: #{tpu_custom_call.1}
  #allocation0 [shape = 'u32[]', space=smem, size = 0x4, offset = 0x4, fixed_abs, tag = 'smem constant byte address 0x4 - core index']
  #allocation1 [shape = 'u32[72,128]{1,0:T(1,128)}', space=vmem, size = 0x9000, scoped, tag = 'internal scratch']
  #allocation2 [shape = 's32[1]{0}', space=sflag, size = 0x4, scoped, tag = 'scratch operand']
  #allocation3 [shape = 's32[]', space=sflag, size = 0x4, offset = 0, fixed_abs, tag = 'sflag constant byte address 0x0 - dummy sync flag']
  #allocation4 [shape = 'u32[0]{0}', space=smem, size = 0, offset = 0, fixed_abs, tag = 'smem constant byte address 0x0 - null']
  %s0 = inlined_call_operand.hbm [shape: f32[2,4,16,16], index: 0, kind: input, shape index: {}]
  %s1 = inlined_call_operand.hbm [shape: f32[2,4,16,16], index: 1, kind: output, shape index: {}]
  %s2 = sld [smem:[#allocation0]]
  $region2: #{tpu_custom_call.1} parent=0
    _
  %s4 = ssub.s32 1, %s2
  %s5 = scalar_select 0, %s4, %s2
  %s7 = sshll.u32 1, 14
  %s8 = sxor.u32 4294967295, %s7
  %s10 = sshll.u32 %s0, 4
  %s11 = int_to_ptr.hbm [resolvable:$true] %s10
  %s12 = sshll.u32 %s1, 4
  %s13 = int_to_ptr.hbm [resolvable:$true] %s12
  %16 = dma.general %s11, 2048, %s13, [#allocation2], [#allocation3], [#allocation4], 0, 0
  %s17 = smul.u32 2, 4
  %s18 = smul.u32 %s17, 16
  %s19 = smul.u32 %s18, 1
  %s20 = sshll.u32 %s19, 4
  %21 = dma.done [#allocation2], %s20
  %22 = vsyncmov [#allocation2]
  %s23 = vpop.sfrf %22
  %p24 = scmp.eq.s32.totalorder %s23, 0
  %p25 = pneg %p24
  %27 = shalt.err (%p25)

</llo_original>
